<compile_context>
chip_gen: v7x
topology: tpu7x:2x2x1
jax: 0.10.0
libtpu: 0.0.40
codegen_flags: <defaults>
</compile_context>

<pallas_src>
import jax
import jax.numpy as jnp
from jax import lax
from jax.experimental import pallas as pl
from jax.experimental.pallas import tpu as pltpu

SMOOTH = 1e-6
BCE_WEIGHT = 0.5
POS_WEIGHT_VALUES = [2.5491, 1.8302, 1.3358, 3.0197, 2.3485, 1.5581, 1.055,
                     2.8711, 2.106, 1.4489, 1.1448, 2.8844, 2.2307, 1.6165,
                     1.4383, 3.2594, 2.7788, 1.9714, 1.4232, 2.3718, 2.8579,
                     1.8734, 2.1939, 2.2624, 2.4966, 2.6428, 3.1541, 0.3, 0.944]

ROW_TILE = 16                    # multiple of 16: works for f32 and bf16
ACC_LANES = 256                  # chunk / accumulator width (multiple of 128)
TARGET_BLOCK_ELEMS = 512 * 1024  # ~2 MiB f32 per input block (tune per chip)
VMEM_LIMIT_BYTES = 48 * 1024 * 1024


def _round_up(x, m):
    return (x + m - 1) // m * m


def _make_kernel(row_tile, lane_tile, acc_w, r_valid, l_valid,
                 n_row_tiles, n_lane_tiles):
    n_chunks = lane_tile // acc_w
    last_row_partial = n_row_tiles * row_tile > r_valid
    last_lane_partial = n_lane_tiles * lane_tile > l_valid

    def kernel(x_ref, y_ref, pwm1_ref, out_ref):
        i = pl.program_id(0)
        j = pl.program_id(1)

        @pl.when(j == 0)
        def _init():
            out_ref[...] = jnp.zeros_like(out_ref)

        # Hoisted (pos_weight - 1) broadcast: once per grid step, reused by
        # every chunk iteration.
        pwm1 = jnp.broadcast_to(pwm1_ref[...].astype(jnp.float32),
                                (row_tile, acc_w))

        def run(mask_rows, mask_lanes):
            if mask_rows:
                rows = i * row_tile + lax.broadcasted_iota(
                    jnp.int32, (row_tile, acc_w), 0)
                row_ok = rows < r_valid

            def body(c, accs):
                a_bce, a_int, a_sig, a_y = accs
                c0 = c * acc_w
                if not isinstance(c0, int):
                    c0 = pl.multiple_of(c0, 128)
                x = x_ref[:, pl.ds(c0, acc_w)].astype(jnp.float32)
                y = y_ref[:, pl.ds(c0, acc_w)].astype(jnp.float32)

                # One exp per element serves both softplus(-x) and sigmoid.
                e = jnp.exp(-jnp.abs(x))
                sp_neg_x = jnp.maximum(-x, 0.0) + jnp.log1p(e)   # softplus(-x)
                # BCEWithLogits w/ pos_weight:
                #   (1-y)*x + (1 + (pw-1)*y) * softplus(-x)
                bce = (1.0 - y) * x + (1.0 + pwm1 * y) * sp_neg_x
                one_pe = 1.0 + e
                d = pl.reciprocal(one_pe, approx=True)
                d = d * (2.0 - one_pe * d)            # Newton step (~1e-7 rel)
                sig = jnp.where(x >= 0.0, d, 1.0 - d)

                if mask_rows or mask_lanes:
                    ok = None
                    if mask_rows:
                        ok = row_ok
                    if mask_lanes:
                        cols = (j * lane_tile + c0 + lax.broadcasted_iota(
                            jnp.int32, (row_tile, acc_w), 1))
                        lane_ok = cols < l_valid
                        ok = lane_ok if ok is None else (ok & lane_ok)
                    zero = jnp.float32(0.0)
                    bce = jnp.where(ok, bce, zero)
                    sig = jnp.where(ok, sig, zero)
                    y = jnp.where(ok, y, zero)

                return (a_bce + bce, a_int + sig * y, a_sig + sig, a_y + y)

            zeros = jnp.zeros((row_tile, acc_w), jnp.float32)
            init = (zeros, zeros, zeros, zeros)
            if n_chunks == 1:
                a_bce, a_int, a_sig, a_y = body(0, init)
            else:
                a_bce, a_int, a_sig, a_y = lax.fori_loop(
                    0, n_chunks, body, init)

            # Resident lane-dense output slab; RMW once per grid step.
            out_ref[0, 0, :, :] += a_bce
            out_ref[0, 1, :, :] += a_int
            out_ref[0, 2, :, :] += a_sig
            out_ref[0, 3, :, :] += a_y

        if not (last_row_partial or last_lane_partial):
            run(False, False)
        else:
            conds = []
            if last_row_partial:
                conds.append(i == n_row_tiles - 1)
            if last_lane_partial:
                conds.append(j == n_lane_tiles - 1)
            edge = conds[0]
            for cnd in conds[1:]:
                edge = jnp.logical_or(edge, cnd)

            @pl.when(edge)
            def _edge():
                run(last_row_partial, last_lane_partial)

            @pl.when(jnp.logical_not(edge))
            def _interior():
                run(False, False)

    return kernel


def combined_bce_dice_loss(logits_nchw, targets_nchw, pos_weight,
                           bce_weight=BCE_WEIGHT, smooth=SMOOTH,
                           row_tile=ROW_TILE,
                           target_block_elems=TARGET_BLOCK_ELEMS,
                           acc_lanes=ACC_LANES):
    # TODO(synk): the PyTorch 3-D targets -> one_hot preprocessing branch is
    # host-side glue and is not implemented here; targets must be (N,C,H,W).
    n, c, h, w = logits_nchw.shape
    r, l = n * c, h * w

    # ---- tiling (no wrapper padding; edge blocks are masked in-kernel) -----
    acc_w = max(128, min(acc_lanes, _round_up(l, 128)))
    lane_cap = max(acc_w, (target_block_elems // row_tile) // acc_w * acc_w)
    lane_tile = min(_round_up(l, acc_w), lane_cap)
    n_lane_tiles = pl.cdiv(l, lane_tile)
    n_row_tiles = pl.cdiv(r, row_tile)

    # ---- operands (no dtype casts / no padding here) ------------------------
    x2d = logits_nchw.reshape(r, l)
    y2d = targets_nchw.reshape(r, l)
    # row index = n*C + c  ->  tiling pos_weight N times gives pw[c] per row.
    pw_m1 = jnp.tile(pos_weight.astype(jnp.float32) - 1.0, n).reshape(r, 1)

    kernel = _make_kernel(row_tile, lane_tile, acc_w, r, l,
                          n_row_tiles, n_lane_tiles)

    out = pl.pallas_call(
        kernel,
        out_shape=jax.ShapeDtypeStruct(
            (n_row_tiles, 4, row_tile, acc_w), jnp.float32),
        grid=(n_row_tiles, n_lane_tiles),
        in_specs=[
            pl.BlockSpec((row_tile, lane_tile), lambda i, j: (i, j)),
            pl.BlockSpec((row_tile, lane_tile), lambda i, j: (i, j)),
            pl.BlockSpec((row_tile, 1), lambda i, j: (i, 0)),
        ],
        out_specs=pl.BlockSpec((1, 4, row_tile, acc_w),
                               lambda i, j: (i, 0, 0, 0)),
        compiler_params=pltpu.CompilerParams(
            dimension_semantics=("parallel", "arbitrary"),
            vmem_limit_bytes=VMEM_LIMIT_BYTES),
    )(x2d, y2d, pw_m1)

    # Tiny final reduction of per-row-tile partial slabs in plain JAX.
    partials = jnp.sum(out, axis=(0, 2, 3))           # (4,)
    bce_sum, inter, sig_sum, tgt_sum = (partials[0], partials[1],
                                        partials[2], partials[3])
    n_elem = jnp.float32(r * l)                        # true element count
    bce = bce_sum / n_elem                             # 'mean' reduction
    dice_score = (2.0 * inter + smooth) / (sig_sum + tgt_sum + smooth)
    dice = 1.0 - dice_score
    return bce_weight * bce + (1.0 - bce_weight) * dice


def reference_loss(logits, targets, pos_weight,
                   bce_weight=BCE_WEIGHT, smooth=SMOOTH):
    """Pure-JAX reference matching the PyTorch forward."""
    x = logits.astype(jnp.float32)
    y = targets.astype(jnp.float32)
    pwb = pos_weight.reshape(1, -1, 1, 1)
    sp_neg_x = jnp.maximum(-x, 0.0) + jnp.log1p(jnp.exp(-jnp.abs(x)))
    bce = jnp.mean((1.0 - y) * x + (1.0 + (pwb - 1.0) * y) * sp_neg_x)
    sig = jax.nn.sigmoid(x)
    inter = jnp.sum(sig * y)
    dice = 1.0 - (2.0 * inter + smooth) / (jnp.sum(sig) + jnp.sum(y) + smooth)
    return bce_weight * bce + (1.0 - bce_weight) * dice


if __name__ == "__main__":
    num_classes = 29          # module default; exercises edge-row masking
    N, H, W = 2, 16, 16
    key = jax.random.PRNGKey(0)
    k1, k2 = jax.random.split(key)

    logits = jax.random.normal(k1, (N, num_classes, H, W), dtype=jnp.float32)
    # targets passed narrow (bf16); cast to f32 happens inside the kernel.
    targets = jax.random.bernoulli(
        k2, p=0.3, shape=(N, num_classes, H, W)).astype(jnp.bfloat16)
    pos_weight = jnp.asarray(POS_WEIGHT_VALUES[:num_classes], dtype=jnp.float32)

    loss_fn = jax.jit(combined_bce_dice_loss)
    loss = jax.block_until_ready(loss_fn(logits, targets, pos_weight))

    ref = jax.block_until_ready(reference_loss(logits, targets, pos_weight))
    assert jnp.allclose(loss, ref, rtol=1e-4, atol=1e-5), (loss, ref)

    print("KERNEL_OK")
</pallas_src>

<mosaic_0001>
module attributes {stable_mosaic.version = 11 : i64} {
  func.func @kernel(%arg0: i32, %arg1: i32, %arg2: memref<16x256xf32, #tpu.memory_space<vmem>>, %arg3: memref<16x256xbf16, #tpu.memory_space<vmem>>, %arg4: memref<16x1xf32, #tpu.memory_space<vmem>>, %arg5: memref<1x4x16x256xf32, #tpu.memory_space<vmem>>) attributes {dimension_semantics = [#tpu.dimension_semantics<parallel>, #tpu.dimension_semantics<arbitrary>], iteration_bounds = array<i64: 4, 1>, scalar_prefetch = 0 : i64, scratch_operands = 0 : i64, tpu.core_type = #tpu.core_type<tc>, window_params = [{transform_indices = @transform_0, window_bounds = array<i64: 16, 256>}, {transform_indices = @transform_1, window_bounds = array<i64: 16, 256>}, {transform_indices = @transform_2, window_bounds = array<i64: 16, 1>}, {transform_indices = @transform_3, window_bounds = array<i64: 1, 4, 16, 256>}]} {
    %c0_i32 = arith.constant 0 : i32
    %0 = arith.cmpi eq, %arg1, %c0_i32 : i32
    %1 = arith.extui %0 : i1 to i32
    %c0_i32_0 = arith.constant 0 : i32
    %2 = arith.cmpi ne, %1, %c0_i32_0 : i32
    scf.if %2 {
      %cst = arith.constant 0.000000e+00 : f32
      %12 = vector.broadcast %cst : f32 to vector<1x4x16x256xf32>
      %c0_4 = arith.constant 0 : index
      %c0_5 = arith.constant 0 : index
      %c0_6 = arith.constant 0 : index
      %c0_7 = arith.constant 0 : index
      %13 = vector.load %arg5[%c0_4, %c0_5, %c0_6, %c0_7] : memref<1x4x16x256xf32, #tpu.memory_space<vmem>>, vector<1x4x16x256xf32>
      tpu.vector_store %arg5[%c0_4, %c0_5, %c0_6, %c0_7], %12 {strides = array<i32>} : memref<1x4x16x256xf32, #tpu.memory_space<vmem>>, vector<1x4x16x256xf32>,
    } else {
    }
    %c0 = arith.constant 0 : index
    %c0_1 = arith.constant 0 : index
    %3 = vector.load %arg4[%c0, %c0_1] : memref<16x1xf32, #tpu.memory_space<vmem>>, vector<16x1xf32>
    %4 = vector.shape_cast %3 : vector<16x1xf32> to vector<16x1xf32>
    %5 = vector.broadcast %4 : vector<16x1xf32> to vector<16x256xf32>
    %c3_i32 = arith.constant 3 : i32
    %6 = arith.cmpi eq, %arg0, %c3_i32 : i32
    %7 = arith.extui %6 : i1 to i32
    %c0_i32_2 = arith.constant 0 : i32
    %8 = arith.cmpi ne, %7, %c0_i32_2 : i32
    scf.if %8 {
      %c16_i32 = arith.constant 16 : i32
      %12 = arith.muli %arg0, %c16_i32 : i32
      %13 = tpu.iota {dimensions = array<i32: 0>} : vector<16x256xi32>
      %14 = vector.broadcast %12 : i32 to vector<16x256xi32>
      %15 = arith.addi %14, %13 : vector<16x256xi32>
      %c58_i32 = arith.constant 58 : i32
      %16 = vector.broadcast %c58_i32 : i32 to vector<16x256xi32>
      %17 = arith.cmpi slt, %15, %16 : vector<16x256xi32>
      %cst = arith.constant 0.000000e+00 : f32
      %18 = vector.broadcast %cst : f32 to vector<16x256xf32>
      %c0_4 = arith.constant 0 : index
      %c0_5 = arith.constant 0 : index
      %19 = vector.load %arg2[%c0_4, %c0_5] : memref<16x256xf32, #tpu.memory_space<vmem>>, vector<16x256xf32>
      %c0_6 = arith.constant 0 : index
      %c0_7 = arith.constant 0 : index
      %20 = vector.load %arg3[%c0_6, %c0_7] : memref<16x256xbf16, #tpu.memory_space<vmem>>, vector<16x256xbf16>
      %21 = arith.extf %20 : vector<16x256xbf16> to vector<16x256xf32>
      %22 = math.absf %19 : vector<16x256xf32>
      %cst_8 = arith.constant 0.000000e+00 : f32
      %23 = vector.broadcast %cst_8 : f32 to vector<16x256xf32>
      %24 = arith.subf %23, %22 : vector<16x256xf32>
      %25 = math.exp %24 : vector<16x256xf32>
      %cst_9 = arith.constant 0.000000e+00 : f32
      %26 = vector.broadcast %cst_9 : f32 to vector<16x256xf32>
      %27 = arith.subf %26, %19 : vector<16x256xf32>
      %cst_10 = arith.constant 0.000000e+00 : f32
      %28 = vector.broadcast %cst_10 : f32 to vector<16x256xf32>
      %29 = arith.maximumf %27, %28 : vector<16x256xf32>
      %30 = math.log1p %25 : vector<16x256xf32>
      %31 = arith.addf %29, %30 : vector<16x256xf32>
      %cst_11 = arith.constant 1.000000e+00 : f32
      %32 = vector.broadcast %cst_11 : f32 to vector<16x256xf32>
      %33 = arith.subf %32, %21 : vector<16x256xf32>
      %34 = arith.mulf %33, %19 : vector<16x256xf32>
      %35 = arith.mulf %5, %21 : vector<16x256xf32>
      %cst_12 = arith.constant 1.000000e+00 : f32
      %36 = vector.broadcast %cst_12 : f32 to vector<16x256xf32>
      %37 = arith.addf %36, %35 : vector<16x256xf32>
      %38 = arith.mulf %37, %31 : vector<16x256xf32>
      %39 = arith.addf %34, %38 : vector<16x256xf32>
      %cst_13 = arith.constant 1.000000e+00 : f32
      %40 = vector.broadcast %cst_13 : f32 to vector<16x256xf32>
      %41 = arith.addf %40, %25 : vector<16x256xf32>
      %42 = tpu.reciprocal %41 {approx = true} : vector<16x256xf32> -> vector<16x256xf32>
      %43 = arith.mulf %41, %42 : vector<16x256xf32>
      %cst_14 = arith.constant 2.000000e+00 : f32
      %44 = vector.broadcast %cst_14 : f32 to vector<16x256xf32>
      %45 = arith.subf %44, %43 : vector<16x256xf32>
      %46 = arith.mulf %42, %45 : vector<16x256xf32>
      %cst_15 = arith.constant 0.000000e+00 : f32
      %47 = vector.broadcast %cst_15 : f32 to vector<16x256xf32>
      %48 = arith.cmpf oge, %19, %47 : vector<16x256xf32>
      %cst_16 = arith.constant 1.000000e+00 : f32
      %49 = vector.broadcast %cst_16 : f32 to vector<16x256xf32>
      %50 = arith.subf %49, %46 : vector<16x256xf32>
      %51 = arith.select %48, %46, %50 : vector<16x256xi1>, vector<16x256xf32>
      %cst_17 = arith.constant 0.000000e+00 : f32
      %52 = vector.broadcast %cst_17 : f32 to vector<16x256xf32>
      %53 = arith.select %17, %39, %52 : vector<16x256xi1>, vector<16x256xf32>
      %cst_18 = arith.constant 0.000000e+00 : f32
      %54 = vector.broadcast %cst_18 : f32 to vector<16x256xf32>
      %55 = arith.select %17, %51, %54 : vector<16x256xi1>, vector<16x256xf32>
      %cst_19 = arith.constant 0.000000e+00 : f32
      %56 = vector.broadcast %cst_19 : f32 to vector<16x256xf32>
      %57 = arith.select %17, %21, %56 : vector<16x256xi1>, vector<16x256xf32>
      %58 = arith.addf %18, %53 : vector<16x256xf32>
      %59 = arith.mulf %55, %57 : vector<16x256xf32>
      %60 = arith.addf %18, %59 : vector<16x256xf32>
      %61 = arith.addf %18, %55 : vector<16x256xf32>
      %62 = arith.addf %18, %57 : vector<16x256xf32>
      %c0_20 = arith.constant 0 : index
      %c0_21 = arith.constant 0 : index
      %c0_22 = arith.constant 0 : index
      %c0_23 = arith.constant 0 : index
      %63 = vector.load %arg5[%c0_20, %c0_21, %c0_22, %c0_23] : memref<1x4x16x256xf32, #tpu.memory_space<vmem>>, vector<1x1x16x256xf32>
      %64 = vector.shape_cast %63 : vector<1x1x16x256xf32> to vector<16x256xf32>
      %65 = arith.addf %64, %58 : vector<16x256xf32>
      %c0_24 = arith.constant 0 : index
      %c0_25 = arith.constant 0 : index
      %c0_26 = arith.constant 0 : index
      %c0_27 = arith.constant 0 : index
      %66 = vector.load %arg5[%c0_24, %c0_25, %c0_26, %c0_27] : memref<1x4x16x256xf32, #tpu.memory_space<vmem>>, vector<1x1x16x256xf32>
      %67 = vector.shape_cast %66 : vector<1x1x16x256xf32> to vector<16x256xf32>
      %68 = vector.shape_cast %65 : vector<16x256xf32> to vector<1x1x16x256xf32>
      tpu.vector_store %arg5[%c0_24, %c0_25, %c0_26, %c0_27], %68 {strides = array<i32>} : memref<1x4x16x256xf32, #tpu.memory_space<vmem>>, vector<1x1x16x256xf32>,
      %c0_28 = arith.constant 0 : index
      %c1 = arith.constant 1 : index
      %c0_29 = arith.constant 0 : index
      %c0_30 = arith.constant 0 : index
      %69 = vector.load %arg5[%c0_28, %c1, %c0_29, %c0_30] : memref<1x4x16x256xf32, #tpu.memory_space<vmem>>, vector<1x1x16x256xf32>
      %70 = vector.shape_cast %69 : vector<1x1x16x256xf32> to vector<16x256xf32>
      %71 = arith.addf %70, %60 : vector<16x256xf32>
      %c0_31 = arith.constant 0 : index
      %c1_32 = arith.constant 1 : index
      %c0_33 = arith.constant 0 : index
      %c0_34 = arith.constant 0 : index
      %72 = vector.load %arg5[%c0_31, %c1_32, %c0_33, %c0_34] : memref<1x4x16x256xf32, #tpu.memory_space<vmem>>, vector<1x1x16x256xf32>
      %73 = vector.shape_cast %72 : vector<1x1x16x256xf32> to vector<16x256xf32>
      %74 = vector.shape_cast %71 : vector<16x256xf32> to vector<1x1x16x256xf32>
      tpu.vector_store %arg5[%c0_31, %c1_32, %c0_33, %c0_34], %74 {strides = array<i32>} : memref<1x4x16x256xf32, #tpu.memory_space<vmem>>, vector<1x1x16x256xf32>,
      %c0_35 = arith.constant 0 : index
      %c2 = arith.constant 2 : index
      %c0_36 = arith.constant 0 : index
      %c0_37 = arith.constant 0 : index
      %75 = vector.load %arg5[%c0_35, %c2, %c0_36, %c0_37] : memref<1x4x16x256xf32, #tpu.memory_space<vmem>>, vector<1x1x16x256xf32>
      %76 = vector.shape_cast %75 : vector<1x1x16x256xf32> to vector<16x256xf32>
      %77 = arith.addf %76, %61 : vector<16x256xf32>
      %c0_38 = arith.constant 0 : index
      %c2_39 = arith.constant 2 : index
      %c0_40 = arith.constant 0 : index
      %c0_41 = arith.constant 0 : index
      %78 = vector.load %arg5[%c0_38, %c2_39, %c0_40, %c0_41] : memref<1x4x16x256xf32, #tpu.memory_space<vmem>>, vector<1x1x16x256xf32>
      %79 = vector.shape_cast %78 : vector<1x1x16x256xf32> to vector<16x256xf32>
      %80 = vector.shape_cast %77 : vector<16x256xf32> to vector<1x1x16x256xf32>
      tpu.vector_store %arg5[%c0_38, %c2_39, %c0_40, %c0_41], %80 {strides = array<i32>} : memref<1x4x16x256xf32, #tpu.memory_space<vmem>>, vector<1x1x16x256xf32>,
      %c0_42 = arith.constant 0 : index
      %c3 = arith.constant 3 : index
      %c0_43 = arith.constant 0 : index
      %c0_44 = arith.constant 0 : index
      %81 = vector.load %arg5[%c0_42, %c3, %c0_43, %c0_44] : memref<1x4x16x256xf32, #tpu.memory_space<vmem>>, vector<1x1x16x256xf32>
      %82 = vector.shape_cast %81 : vector<1x1x16x256xf32> to vector<16x256xf32>
      %83 = arith.addf %82, %62 : vector<16x256xf32>
      %c0_45 = arith.constant 0 : index
      %c3_46 = arith.constant 3 : index
      %c0_47 = arith.constant 0 : index
      %c0_48 = arith.constant 0 : index
      %84 = vector.load %arg5[%c0_45, %c3_46, %c0_47, %c0_48] : memref<1x4x16x256xf32, #tpu.memory_space<vmem>>, vector<1x1x16x256xf32>
      %85 = vector.shape_cast %84 : vector<1x1x16x256xf32> to vector<16x256xf32>
      %86 = vector.shape_cast %83 : vector<16x256xf32> to vector<1x1x16x256xf32>
      tpu.vector_store %arg5[%c0_45, %c3_46, %c0_47, %c0_48], %86 {strides = array<i32>} : memref<1x4x16x256xf32, #tpu.memory_space<vmem>>, vector<1x1x16x256xf32>,
    } else {
    }
    %true = arith.constant true
    %9 = arith.xori %6, %true : i1
    %10 = arith.extui %9 : i1 to i32
    %c0_i32_3 = arith.constant 0 : i32
    %11 = arith.cmpi ne, %10, %c0_i32_3 : i32
    scf.if %11 {
      %cst = arith.constant 0.000000e+00 : f32
      %12 = vector.broadcast %cst : f32 to vector<16x256xf32>
      %c0_4 = arith.constant 0 : index
      %c0_5 = arith.constant 0 : index
      %13 = vector.load %arg2[%c0_4, %c0_5] : memref<16x256xf32, #tpu.memory_space<vmem>>, vector<16x256xf32>
      %c0_6 = arith.constant 0 : index
      %c0_7 = arith.constant 0 : index
      %14 = vector.load %arg3[%c0_6, %c0_7] : memref<16x256xbf16, #tpu.memory_space<vmem>>, vector<16x256xbf16>
      %15 = arith.extf %14 : vector<16x256xbf16> to vector<16x256xf32>
      %16 = math.absf %13 : vector<16x256xf32>
      %cst_8 = arith.constant 0.000000e+00 : f32
      %17 = vector.broadcast %cst_8 : f32 to vector<16x256xf32>
      %18 = arith.subf %17, %16 : vector<16x256xf32>
      %19 = math.exp %18 : vector<16x256xf32>
      %cst_9 = arith.constant 0.000000e+00 : f32
      %20 = vector.broadcast %cst_9 : f32 to vector<16x256xf32>
      %21 = arith.subf %20, %13 : vector<16x256xf32>
      %cst_10 = arith.constant 0.000000e+00 : f32
      %22 = vector.broadcast %cst_10 : f32 to vector<16x256xf32>
      %23 = arith.maximumf %21, %22 : vector<16x256xf32>
      %24 = math.log1p %19 : vector<16x256xf32>
      %25 = arith.addf %23, %24 : vector<16x256xf32>
      %cst_11 = arith.constant 1.000000e+00 : f32
      %26 = vector.broadcast %cst_11 : f32 to vector<16x256xf32>
      %27 = arith.subf %26, %15 : vector<16x256xf32>
      %28 = arith.mulf %27, %13 : vector<16x256xf32>
      %29 = arith.mulf %5, %15 : vector<16x256xf32>
      %cst_12 = arith.constant 1.000000e+00 : f32
      %30 = vector.broadcast %cst_12 : f32 to vector<16x256xf32>
      %31 = arith.addf %30, %29 : vector<16x256xf32>
      %32 = arith.mulf %31, %25 : vector<16x256xf32>
      %33 = arith.addf %28, %32 : vector<16x256xf32>
      %cst_13 = arith.constant 1.000000e+00 : f32
      %34 = vector.broadcast %cst_13 : f32 to vector<16x256xf32>
      %35 = arith.addf %34, %19 : vector<16x256xf32>
      %36 = tpu.reciprocal %35 {approx = true} : vector<16x256xf32> -> vector<16x256xf32>
      %37 = arith.mulf %35, %36 : vector<16x256xf32>
      %cst_14 = arith.constant 2.000000e+00 : f32
      %38 = vector.broadcast %cst_14 : f32 to vector<16x256xf32>
      %39 = arith.subf %38, %37 : vector<16x256xf32>
      %40 = arith.mulf %36, %39 : vector<16x256xf32>
      %cst_15 = arith.constant 0.000000e+00 : f32
      %41 = vector.broadcast %cst_15 : f32 to vector<16x256xf32>
      %42 = arith.cmpf oge, %13, %41 : vector<16x256xf32>
      %cst_16 = arith.constant 1.000000e+00 : f32
      %43 = vector.broadcast %cst_16 : f32 to vector<16x256xf32>
      %44 = arith.subf %43, %40 : vector<16x256xf32>
      %45 = arith.select %42, %40, %44 : vector<16x256xi1>, vector<16x256xf32>
      %46 = arith.addf %12, %33 : vector<16x256xf32>
      %47 = arith.mulf %45, %15 : vector<16x256xf32>
      %48 = arith.addf %12, %47 : vector<16x256xf32>
      %49 = arith.addf %12, %45 : vector<16x256xf32>
      %50 = arith.addf %12, %15 : vector<16x256xf32>
      %c0_17 = arith.constant 0 : index
      %c0_18 = arith.constant 0 : index
      %c0_19 = arith.constant 0 : index
      %c0_20 = arith.constant 0 : index
      %51 = vector.load %arg5[%c0_17, %c0_18, %c0_19, %c0_20] : memref<1x4x16x256xf32, #tpu.memory_space<vmem>>, vector<1x1x16x256xf32>
      %52 = vector.shape_cast %51 : vector<1x1x16x256xf32> to vector<16x256xf32>
      %53 = arith.addf %52, %46 : vector<16x256xf32>
      %c0_21 = arith.constant 0 : index
      %c0_22 = arith.constant 0 : index
      %c0_23 = arith.constant 0 : index
      %c0_24 = arith.constant 0 : index
      %54 = vector.load %arg5[%c0_21, %c0_22, %c0_23, %c0_24] : memref<1x4x16x256xf32, #tpu.memory_space<vmem>>, vector<1x1x16x256xf32>
      %55 = vector.shape_cast %54 : vector<1x1x16x256xf32> to vector<16x256xf32>
      %56 = vector.shape_cast %53 : vector<16x256xf32> to vector<1x1x16x256xf32>
      tpu.vector_store %arg5[%c0_21, %c0_22, %c0_23, %c0_24], %56 {strides = array<i32>} : memref<1x4x16x256xf32, #tpu.memory_space<vmem>>, vector<1x1x16x256xf32>,
      %c0_25 = arith.constant 0 : index
      %c1 = arith.constant 1 : index
      %c0_26 = arith.constant 0 : index
      %c0_27 = arith.constant 0 : index
      %57 = vector.load %arg5[%c0_25, %c1, %c0_26, %c0_27] : memref<1x4x16x256xf32, #tpu.memory_space<vmem>>, vector<1x1x16x256xf32>
      %58 = vector.shape_cast %57 : vector<1x1x16x256xf32> to vector<16x256xf32>
      %59 = arith.addf %58, %48 : vector<16x256xf32>
      %c0_28 = arith.constant 0 : index
      %c1_29 = arith.constant 1 : index
      %c0_30 = arith.constant 0 : index
      %c0_31 = arith.constant 0 : index
      %60 = vector.load %arg5[%c0_28, %c1_29, %c0_30, %c0_31] : memref<1x4x16x256xf32, #tpu.memory_space<vmem>>, vector<1x1x16x256xf32>
      %61 = vector.shape_cast %60 : vector<1x1x16x256xf32> to vector<16x256xf32>
      %62 = vector.shape_cast %59 : vector<16x256xf32> to vector<1x1x16x256xf32>
      tpu.vector_store %arg5[%c0_28, %c1_29, %c0_30, %c0_31], %62 {strides = array<i32>} : memref<1x4x16x256xf32, #tpu.memory_space<vmem>>, vector<1x1x16x256xf32>,
      %c0_32 = arith.constant 0 : index
      %c2 = arith.constant 2 : index
      %c0_33 = arith.constant 0 : index
      %c0_34 = arith.constant 0 : index
      %63 = vector.load %arg5[%c0_32, %c2, %c0_33, %c0_34] : memref<1x4x16x256xf32, #tpu.memory_space<vmem>>, vector<1x1x16x256xf32>
      %64 = vector.shape_cast %63 : vector<1x1x16x256xf32> to vector<16x256xf32>
      %65 = arith.addf %64, %49 : vector<16x256xf32>
      %c0_35 = arith.constant 0 : index
      %c2_36 = arith.constant 2 : index
      %c0_37 = arith.constant 0 : index
      %c0_38 = arith.constant 0 : index
      %66 = vector.load %arg5[%c0_35, %c2_36, %c0_37, %c0_38] : memref<1x4x16x256xf32, #tpu.memory_space<vmem>>, vector<1x1x16x256xf32>
      %67 = vector.shape_cast %66 : vector<1x1x16x256xf32> to vector<16x256xf32>
      %68 = vector.shape_cast %65 : vector<16x256xf32> to vector<1x1x16x256xf32>
      tpu.vector_store %arg5[%c0_35, %c2_36, %c0_37, %c0_38], %68 {strides = array<i32>} : memref<1x4x16x256xf32, #tpu.memory_space<vmem>>, vector<1x1x16x256xf32>,
      %c0_39 = arith.constant 0 : index
      %c3 = arith.constant 3 : index
      %c0_40 = arith.constant 0 : index
      %c0_41 = arith.constant 0 : index
      %69 = vector.load %arg5[%c0_39, %c3, %c0_40, %c0_41] : memref<1x4x16x256xf32, #tpu.memory_space<vmem>>, vector<1x1x16x256xf32>
      %70 = vector.shape_cast %69 : vector<1x1x16x256xf32> to vector<16x256xf32>
      %71 = arith.addf %70, %50 : vector<16x256xf32>
      %c0_42 = arith.constant 0 : index
      %c3_43 = arith.constant 3 : index
      %c0_44 = arith.constant 0 : index
      %c0_45 = arith.constant 0 : index
      %72 = vector.load %arg5[%c0_42, %c3_43, %c0_44, %c0_45] : memref<1x4x16x256xf32, #tpu.memory_space<vmem>>, vector<1x1x16x256xf32>
      %73 = vector.shape_cast %72 : vector<1x1x16x256xf32> to vector<16x256xf32>
      %74 = vector.shape_cast %71 : vector<16x256xf32> to vector<1x1x16x256xf32>
      tpu.vector_store %arg5[%c0_42, %c3_43, %c0_44, %c0_45], %74 {strides = array<i32>} : memref<1x4x16x256xf32, #tpu.memory_space<vmem>>, vector<1x1x16x256xf32>,
    } else {
    }
    return
  }
  func.func @transform_0(%arg0: i32, %arg1: i32) -> (i32, i32) {
    %c0_i32 = arith.constant 0 : i32
    return %arg0, %arg1 : i32, i32
  }
  func.func @transform_1(%arg0: i32, %arg1: i32) -> (i32, i32) {
    %c0_i32 = arith.constant 0 : i32
    return %arg0, %arg1 : i32, i32
  }
  func.func @transform_2(%arg0: i32, %arg1: i32) -> (i32, i32) {
    %c0_i32 = arith.constant 0 : i32
    %c0_i32_0 = arith.constant 0 : i32
    return %arg0, %c0_i32 : i32, i32
  }
  func.func @transform_3(%arg0: i32, %arg1: i32) -> (i32, i32, i32, i32) {
    %c0_i32 = arith.constant 0 : i32
    %c0_i32_0 = arith.constant 0 : i32
    %c0_i32_1 = arith.constant 0 : i32
    %c0_i32_2 = arith.constant 0 : i32
    return %arg0, %c0_i32, %c0_i32_0, %c0_i32_1 : i32, i32, i32, i32
  }
}

</mosaic_0001>

<llo_original>
// kernel: tile.8
$region0: #{tile.8}
  #allocation0 [shape = 's32[1]{0}', space=sflag, size = 0x4, scoped, tag = 'scoped memory for tile.8']
  %s0 = inlined_call_operand.vmem [shape: f32[29], index: 0, kind: input, shape index: {}]
  %s1 = inlined_call_operand.vmem [shape: f32[2,29], index: 1, kind: output, shape index: {}]
  // Predicated region
  $region2: #{tile.8} parent=0 // pred_check
    _
  $region3: #{tile.8} parent=0 // pred_check_branch
    %3 = sbr.rel (0) target = $region5
  $region4: #{tile.8} parent=0 // pred_region
    _
  $region5: #{tile.8} parent=0 // pred_fallthru
    _
  %v4 = vld [vmem:[%s0] ss:$0 sm:$0xff]
  %5 = vst [vmem:[%s1] sm:$0x3] %v4

// kernel: tile.0
$region0: #{tile.0}
  %s0 = inlined_call_operand.vmem [shape: f32[2,29], index: 0, kind: input, shape index: {}]
  %s1 = inlined_call_operand.vmem [shape: f32[58,1], index: 1, kind: output, shape index: {}]
  $region1: #{tile.0} parent=0
    #allocation0 [shape = 'u8[4096]{0}', space=vmem, size = 0x1000, scoped, tag = 'scoped mem for input reshape']
    %s3 = sshllo.u32 0, 2
    %v4 = vld [vmem:[%s0] sm:%s3]
    %5 = vst [vmem:[#allocation0] sm:%s3] %v4
    %v6 = vld [vmem:[#allocation0] sm:$0x3]
    %vm7 = vcmask 7168
    %8 = vst.msk [vmem:[%s1] ss:$29 sm:$0x3] %vm7, %v6
    %v9 = vld [vmem:[#allocation0] sm:$0x3]
    %10 = vrot.lane.b32.xlu0 %v9, 127
    %v11 = vpop.permute.xlu0 %10
    %vm12 = vcmask 7168
    %s13 = scalar_lea.vmem %s1, 1
    %14 = vst.msk [vmem:[%s13] ss:$29 sm:$0x3] %vm12, %v11
    %v15 = vld [vmem:[#allocation0] sm:$0x3]
    %16 = vrot.lane.b32.xlu0 %v15, 126
    %v17 = vpop.permute.xlu0 %16
    %vm18 = vcmask 7168
    %s19 = scalar_lea.vmem %s1, 2
    %20 = vst.msk [vmem:[%s19] ss:$29 sm:$0x3] %vm18, %v17
    %s21 = scalar_lea.vmem [#allocation0], 1
    %s22 = smov 3
    %v23 = vld [vmem:[%s21] ss:$-1 sm:%s22]
    %24 = vrot.lane.b32.xlu0 %v23, 125
    %v25 = vpop.permute.xlu0 %24
    %vm26 = vcmask 7168
    %s27 = scalar_lea.vmem %s1, 32
    %28 = vst.msk [vmem:[%s27] ss:$-29 sm:$0x3] %vm26, %v25
    %s29 = scalar_lea.vmem [#allocation0], 1
    %s30 = smov 3
    %v31 = vld [vmem:[%s29] ss:$-1 sm:%s30]
    %32 = vrot.lane.b32.xlu0 %v31, 124
    %v33 = vpop.permute.xlu0 %32
    %vm34 = vcmask 7168
    %s35 = scalar_lea.vmem %s1, 33
    %36 = vst.msk [vmem:[%s35] ss:$-29 sm:$0x3] %vm34, %v33
    %s37 = scalar_lea.vmem [#allocation0], 1
    %s38 = smov 3
    %v39 = vld [vmem:[%s37] ss:$-1 sm:%s38]
    %40 = vrot.lane.b32.xlu0 %v39, 123
    %v41 = vpop.permute.xlu0 %40
    %vm42 = vcmask 7168
    %s43 = scalar_lea.vmem %s1, 34
    %44 = vst.msk [vmem:[%s43] ss:$-29 sm:$0x3] %vm42, %v41
    %s45 = scalar_lea.vmem [#allocation0], 1
    %s46 = smov 3
    %v47 = vld [vmem:[%s45] ss:$-1 sm:%s46]
    %48 = vrot.lane.b32.xlu0 %v47, 122
    %v49 = vpop.permute.xlu0 %48
    %vm50 = vcmask 7168
    %s51 = scalar_lea.vmem %s1, 35
    %52 = vst.msk [vmem:[%s51] ss:$-29 sm:$0x3] %vm50, %v49
    %s53 = scalar_lea.vmem [#allocation0], 1
    %s54 = smov 3
    %v55 = vld [vmem:[%s53] ss:$-1 sm:%s54]
    %56 = vrot.lane.b32.xlu0 %v55, 121
    %v57 = vpop.permute.xlu0 %56
    %vm58 = vcmask 7168
    %s59 = scalar_lea.vmem %s1, 36
    %60 = vst.msk [vmem:[%s59] ss:$-29 sm:$0x3] %vm58, %v57
    %s61 = scalar_lea.vmem [#allocation0], 1
    %s62 = smov 3
    %v63 = vld [vmem:[%s61] ss:$-1 sm:%s62]
    %64 = vrot.lane.b32.xlu0 %v63, 120
    %v65 = vpop.permute.xlu0 %64
    %vm66 = vcmask 7168
    %s67 = scalar_lea.vmem %s1, 37
    %68 = vst.msk [vmem:[%s67] ss:$-29 sm:$0x3] %vm66, %v65
    %s69 = scalar_lea.vmem [#allocation0], 1
    %s70 = smov 3
    %v71 = vld [vmem:[%s69] ss:$-1 sm:%s70]
    %72 = vrot.lane.b32.xlu0 %v71, 119
    %v73 = vpop.permute.xlu0 %72
    %vm74 = vcmask 7168
    %s75 = scalar_lea.vmem %s1, 38
    %76 = vst.msk [vmem:[%s75] ss:$-29 sm:$0x3] %vm74, %v73
    %s77 = scalar_lea.vmem [#allocation0], 1
    %s78 = smov 3
    %v79 = vld [vmem:[%s77] ss:$-1 sm:%s78]
    %80 = vrot.lane.b32.xlu0 %v79, 118
    %v81 = vpop.permute.xlu0 %80
    %vm82 = vcmask 7168
    %s83 = scalar_lea.vmem %s1, 39
    %84 = vst.msk [vmem:[%s83] ss:$-29 sm:$0x3] %vm82, %v81
    %s85 = scalar_lea.vmem [#allocation0], 1
    %s86 = smov 3
    %v87 = vld [vmem:[%s85] ss:$-1 sm:%s86]
    %88 = vrot.lane.b32.xlu0 %v87, 117
    %v89 = vpop.permute.xlu0 %88
    %vm90 = vcmask 7168
    %s91 = scalar_lea.vmem %s1, 40
    %92 = vst.msk [vmem:[%s91] ss:$-29 sm:$0x3] %vm90, %v89
    %s93 = scalar_lea.vmem [#allocation0], 1
    %s94 = smov 3
    %v95 = vld [vmem:[%s93] ss:$-1 sm:%s94]
    %96 = vrot.lane.b32.xlu0 %v95, 116
    %v97 = vpop.permute.xlu0 %96
    %vm98 = vcmask 7168
    %s99 = scalar_lea.vmem %s1, 41
    %100 = vst.msk [vmem:[%s99] ss:$-29 sm:$0x3] %vm98, %v97
    %s101 = scalar_lea.vmem [#allocation0], 1
    %s102 = smov 3
    %v103 = vld [vmem:[%s101] ss:$-1 sm:%s102]
    %104 = vrot.lane.b32.xlu0 %v103, 115
    %v105 = vpop.permute.xlu0 %104
    %vm106 = vcmask 7168
    %s107 = scalar_lea.vmem %s1, 42
    %108 = vst.msk [vmem:[%s107] ss:$-29 sm:$0x3] %vm106, %v105
    %s109 = scalar_lea.vmem [#allocation0], 1
    %s110 = smov 3
    %v111 = vld [vmem:[%s109] ss:$-1 sm:%s110]
    %112 = vrot.lane.b32.xlu0 %v111, 114
    %v113 = vpop.permute.xlu0 %112
    %vm114 = vcmask 7168
    %s115 = scalar_lea.vmem %s1, 43
    %116 = vst.msk [vmem:[%s115] ss:$-29 sm:$0x3] %vm114, %v113
    %s117 = scalar_lea.vmem [#allocation0], 1
    %s118 = smov 3
    %v119 = vld [vmem:[%s117] ss:$-1 sm:%s118]
    %120 = vrot.lane.b32.xlu0 %v119, 113
    %v121 = vpop.permute.xlu0 %120
    %vm122 = vcmask 7168
    %s123 = scalar_lea.vmem %s1, 44
    %124 = vst.msk [vmem:[%s123] ss:$-29 sm:$0x3] %vm122, %v121
    %s125 = scalar_lea.vmem [#allocation0], 1
    %s126 = smov 3
    %v127 = vld [vmem:[%s125] ss:$-1 sm:%s126]
    %128 = vrot.lane.b32.xlu0 %v127, 112
    %v129 = vpop.permute.xlu0 %128
    %vm130 = vcmask 7168
    %s131 = scalar_lea.vmem %s1, 45
    %132 = vst.msk [vmem:[%s131] ss:$-29 sm:$0x3] %vm130, %v129
    %s133 = scalar_lea.vmem [#allocation0], 1
    %s134 = smov 3
    %v135 = vld [vmem:[%s133] ss:$-1 sm:%s134]
    %136 = vrot.lane.b32.xlu0 %v135, 111
    %v137 = vpop.permute.xlu0 %136
    %vm138 = vcmask 7168
    %s139 = scalar_lea.vmem %s1, 46
    %140 = vst.msk [vmem:[%s139] ss:$-29 sm:$0x3] %vm138, %v137
    %s141 = scalar_lea.vmem [#allocation0], 1
    %s142 = smov 3
    %v143 = vld [vmem:[%s141] ss:$-1 sm:%s142]
    %144 = vrot.lane.b32.xlu0 %v143, 110
    %v145 = vpop.permute.xlu0 %144
    %vm146 = vcmask 7168
    %s147 = scalar_lea.vmem %s1, 47
    %148 = vst.msk [vmem:[%s147] ss:$-29 sm:$0x3] %vm146, %v145
    %s149 = scalar_lea.vmem [#allocation0], 1
    %s150 = smov 3
    %v151 = vld [vmem:[%s149] ss:$-1 sm:%s150]
    %152 = vrot.lane.b32.xlu0 %v151, 109
    %v153 = vpop.permute.xlu0 %152
    %vm154 = vcmask 7168
    %s155 = scalar_lea.vmem %s1, 48
    %156 = vst.msk [vmem:[%s155] ss:$-29 sm:$0x3] %vm154, %v153
    %s157 = scalar_lea.vmem [#allocation0], 1
    %s158 = smov 3
    %v159 = vld [vmem:[%s157] ss:$-1 sm:%s158]
    %160 = vrot.lane.b32.xlu0 %v159, 108
    %v161 = vpop.permute.xlu0 %160
    %vm162 = vcmask 7168
    %s163 = scalar_lea.vmem %s1, 49
    %164 = vst.msk [vmem:[%s163] ss:$-29 sm:$0x3] %vm162, %v161
    %s165 = scalar_lea.vmem [#allocation0], 1
    %s166 = smov 3
    %v167 = vld [vmem:[%s165] ss:$-1 sm:%s166]
    %168 = vrot.lane.b32.xlu0 %v167, 107
    %v169 = vpop.permute.xlu0 %168
    %vm170 = vcmask 7168
    %s171 = scalar_lea.vmem %s1, 50
    %172 = vst.msk [vmem:[%s171] ss:$-29 sm:$0x3] %vm170, %v169
    %s173 = scalar_lea.vmem [#allocation0], 1
    %s174 = smov 3
    %v175 = vld [vmem:[%s173] ss:$-1 sm:%s174]
    %176 = vrot.lane.b32.xlu0 %v175, 106
    %v177 = vpop.permute.xlu0 %176
    %vm178 = vcmask 7168
    %s179 = scalar_lea.vmem %s1, 51
    %180 = vst.msk [vmem:[%s179] ss:$-29 sm:$0x3] %vm178, %v177
    %s181 = scalar_lea.vmem [#allocation0], 1
    %s182 = smov 3
    %v183 = vld [vmem:[%s181] ss:$-1 sm:%s182]
    %184 = vrot.lane.b32.xlu0 %v183, 105
    %v185 = vpop.permute.xlu0 %184
    %vm186 = vcmask 7168
    %s187 = scalar_lea.vmem %s1, 52
    %188 = vst.msk [vmem:[%s187] ss:$-29 sm:$0x3] %vm186, %v185
    %s189 = scalar_lea.vmem [#allocation0], 1
    %s190 = smov 3
    %v191 = vld [vmem:[%s189] ss:$-1 sm:%s190]
    %192 = vrot.lane.b32.xlu0 %v191, 104
    %v193 = vpop.permute.xlu0 %192
    %vm194 = vcmask 7168
    %s195 = scalar_lea.vmem %s1, 53
    %196 = vst.msk [vmem:[%s195] ss:$-29 sm:$0x3] %vm194, %v193
    %s197 = scalar_lea.vmem [#allocation0], 1
    %s198 = smov 3
    %v199 = vld [vmem:[%s197] ss:$-1 sm:%s198]
    %200 = vrot.lane.b32.xlu0 %v199, 103
    %v201 = vpop.permute.xlu0 %200
    %vm202 = vcmask 7168
    %s203 = scalar_lea.vmem %s1, 54
    %204 = vst.msk [vmem:[%s203] ss:$-29 sm:$0x3] %vm202, %v201
    %s205 = scalar_lea.vmem [#allocation0], 1
    %s206 = smov 3
    %v207 = vld [vmem:[%s205] ss:$-1 sm:%s206]
    %208 = vrot.lane.b32.xlu0 %v207, 102
    %v209 = vpop.permute.xlu0 %208
    %vm210 = vcmask 7168
    %s211 = scalar_lea.vmem %s1, 55
    %212 = vst.msk [vmem:[%s211] ss:$-29 sm:$0x3] %vm210, %v209
    %s213 = scalar_lea.vmem [#allocation0], 1
    %s214 = smov 3
    %v215 = vld [vmem:[%s213] ss:$-1 sm:%s214]
    %216 = vrot.lane.b32.xlu0 %v215, 101
    %v217 = vpop.permute.xlu0 %216
    %vm218 = vcmask 7168
    %s219 = scalar_lea.vmem %s1, 56
    %220 = vst.msk [vmem:[%s219] ss:$-29 sm:$0x3] %vm218, %v217
    %s221 = scalar_lea.vmem [#allocation0], 1
    %s222 = smov 3
    %v223 = vld [vmem:[%s221] ss:$-1 sm:%s222]
    %224 = vrot.lane.b32.xlu0 %v223, 100
    %v225 = vpop.permute.xlu0 %224
    %vm226 = vcmask 7168
    %s227 = scalar_lea.vmem %s1, 57
    %228 = vst.msk [vmem:[%s227] ss:$-29 sm:$0x3] %vm226, %v225

// kernel: combined_bce_dice_loss.1
$region0: #{combined_bce_dice_loss.1}
  #allocation0 [shape = 'u32[]', space=smem, size = 0x4, offset = 0x4, fixed_abs, tag = 'smem constant byte address 0x4 - core index']
  #allocation1 [shape = 'u32[144,128]{1,0:T(1,128)}', space=vmem, size = 0x12000, scoped, tag = 'internal scratch']
  %s0 = inlined_call_operand.vmem [shape: f32[58,256], index: 0, kind: input, shape index: {}]
  %s1 = inlined_call_operand.vmem [shape: bf16[58,256], index: 1, kind: input, shape index: {}]
  %s2 = inlined_call_operand.vmem [shape: f32[58,1], index: 2, kind: input, shape index: {}]
  %s3 = inlined_call_operand.vmem [shape: f32[4,4,16,256], index: 3, kind: output, shape index: {}]
  %s4 = sld [smem:[#allocation0]]
  $region57: #{combined_bce_dice_loss.1} parent=0
    _
  %s6 = ssub.s32 1, %s4
  %s7 = scalar_select 0, %s6, %s4
  loop: start=0, step=1, limit=6
  $region2: #{combined_bce_dice_loss.1} parent=0 // loop_pre_header
    _
  $region3: #{combined_bce_dice_loss.1} parent=0 // loop_header
    %s9 = sphi 0, %s13
    %p10 = scmp.ge.s32.totalorder %s9, 6
    %s16 = sphi 0, %s28
    %s17 = sphi 0, %s24
    %s18 = sphi 0, %s16
    %s19 = sphi 0, %s17
    %s20 = sphi 0, %s18
    %s21 = sphi 0, %s19
    %s33 = sphi 0, %s35
    %s36 = sphi 0, %s33
    %s37 = sphi 0, %s36
    %s53 = sphi 0, %s37
    %s61 = sphi 0, %s63
    %s64 = sphi 0, %s61
    %s65 = sphi 0, %s64
    %s81 = sphi 0, %s65
    %s87 = sphi 0, %s89
    %s90 = sphi 0, %s87
    %s91 = sphi 0, %s90
    %s107 = sphi 0, %s91
    %s113 = sphi 0, %s115
    %s116 = sphi 0, %s113
    %s117 = sphi 0, %s116
    %s133 = sphi 0, %s117
  $region4: #{combined_bce_dice_loss.1} parent=0 // loop_header_branch
    %12 = sbr.rel (%p10) target = $region8
  $region5: #{combined_bce_dice_loss.1} parent=0 // loop_body
    %s14 = ssub.s32 %s9, 1
    %s15 = ssub.s32 %s9, 2
    %s22 = sadd.s32 1, %s17
    %p23 = scmp.ge.s32.totalorder %s22, 1
    %s24 = scalar_select %p23, 0, %s22
    %s25 = sadd.s32 1, %s16
    %s26 = scalar_select %p23, %s25, %s16
    %p27 = scmp.ge.s32.totalorder %s26, 4
    %s28 = scalar_select %p27, 0, %s26
    %s29 = ssub.s32 %s16, %s28
    %s30 = ssub.s32 %s17, %s24
    %s31 = sor.u32 %s29, %s30
    %p32 = scmp.eq.s32.totalorder %s31, 0
    %s34 = sadd.s32 %s33, 1
    %s35 = scalar_select %p32, %s33, %s34
    %p38 = pneg %p32
    %p39 = scmp.eq.s32.totalorder %s9, 3
    %p40 = por %p38, %p39
    %p41 = scmp.ne.s32.totalorder %s33, %s36
    %p42 = scmp.eq.s32.totalorder %s9, 0
    %p43 = por %p41, %p42
    %p44 = scmp.ne.s32.totalorder %s33, %s36
    %p45 = scmp.eq.s32.totalorder %s14, 3
    %p46 = por %p44, %p45
    %p47 = scmp.ne.s32.totalorder %s36, %s37
    %p48 = scmp.eq.s32.totalorder %s14, 0
    %p49 = por %p47, %p48
    %p50 = scmp.ne.s32.totalorder %s36, %s37
    %p51 = scmp.eq.s32.totalorder %s15, 3
    %p52 = por %p50, %p51
    %p54 = scmp.ne.s32.totalorder %s37, %s53
    %p55 = scmp.eq.s32.totalorder %s15, 0
    %p56 = por %p54, %p55
    %s57 = ssub.s32 %s16, %s28
    %s58 = ssub.s32 %s17, %s24
    %s59 = sor.u32 %s57, %s58
    %p60 = scmp.eq.s32.totalorder %s59, 0
    %s62 = sadd.s32 %s61, 1
    %s63 = scalar_select %p60, %s61, %s62
    %p66 = pneg %p60
    %p67 = scmp.eq.s32.totalorder %s9, 3
    %p68 = por %p66, %p67
    %p69 = scmp.ne.s32.totalorder %s61, %s64
    %p70 = scmp.eq.s32.totalorder %s9, 0
    %p71 = por %p69, %p70
    %p72 = scmp.ne.s32.totalorder %s61, %s64
    %p73 = scmp.eq.s32.totalorder %s14, 3
    %p74 = por %p72, %p73
    %p75 = scmp.ne.s32.totalorder %s64, %s65
    %p76 = scmp.eq.s32.totalorder %s14, 0
    %p77 = por %p75, %p76
    %p78 = scmp.ne.s32.totalorder %s64, %s65
    %p79 = scmp.eq.s32.totalorder %s15, 3
    %p80 = por %p78, %p79
    %p82 = scmp.ne.s32.totalorder %s65, %s81
    %p83 = scmp.eq.s32.totalorder %s15, 0
    %p84 = por %p82, %p83
    %s85 = ssub.s32 %s16, %s28
    %p86 = scmp.eq.s32.totalorder %s85, 0
    %s88 = sadd.s32 %s87, 1
    %s89 = scalar_select %p86, %s87, %s88
    %p92 = pneg %p86
    %p93 = scmp.eq.s32.totalorder %s9, 3
    %p94 = por %p92, %p93
    %p95 = scmp.ne.s32.totalorder %s87, %s90
    %p96 = scmp.eq.s32.totalorder %s9, 0
    %p97 = por %p95, %p96
    %p98 = scmp.ne.s32.totalorder %s87, %s90
    %p99 = scmp.eq.s32.totalorder %s14, 3
    %p100 = por %p98, %p99
    %p101 = scmp.ne.s32.totalorder %s90, %s91
    %p102 = scmp.eq.s32.totalorder %s14, 0
    %p103 = por %p101, %p102
    %p104 = scmp.ne.s32.totalorder %s90, %s91
    %p105 = scmp.eq.s32.totalorder %s15, 3
    %p106 = por %p104, %p105
    %p108 = scmp.ne.s32.totalorder %s91, %s107
    %p109 = scmp.eq.s32.totalorder %s15, 0
    %p110 = por %p108, %p109
    %s111 = ssub.s32 %s16, %s28
    %p112 = scmp.eq.s32.totalorder %s111, 0
    %s114 = sadd.s32 %s113, 1
    %s115 = scalar_select %p112, %s113, %s114
    %p118 = pneg %p112
    %p119 = scmp.eq.s32.totalorder %s9, 3
    %p120 = por %p118, %p119
    %p121 = scmp.ne.s32.totalorder %s113, %s116
    %p122 = scmp.eq.s32.totalorder %s9, 0
    %p123 = por %p121, %p122
    %p124 = scmp.ne.s32.totalorder %s113, %s116
    %p125 = scmp.eq.s32.totalorder %s14, 3
    %p126 = por %p124, %p125
    %p127 = scmp.ne.s32.totalorder %s116, %s117
    %p128 = scmp.eq.s32.totalorder %s14, 0
    %p129 = por %p127, %p128
    %p130 = scmp.ne.s32.totalorder %s116, %s117
    %p131 = scmp.eq.s32.totalorder %s15, 3
    %p132 = por %p130, %p131
    %p134 = scmp.ne.s32.totalorder %s117, %s133
    %p135 = scmp.eq.s32.totalorder %s15, 0
    %p136 = por %p134, %p135
    %p137 = scmp.le.s32.totalorder 1, %s9
    %p138 = scmp.lt.s32.totalorder %s9, 5
    %p139 = pnand %p137, %p138
    %p140 = pneg %p139
    // Predicated region
    $region9: #{combined_bce_dice_loss.1} parent=5 // pred_check
      _
    $region10: #{combined_bce_dice_loss.1} parent=5 // pred_check_branch
      %142 = sbr.rel (%p139) target = $region12
    $region11: #{combined_bce_dice_loss.1} parent=5 // pred_region
      %s143 = ssub.s32 %s9, 1
    $region12: #{combined_bce_dice_loss.1} parent=5 // pred_fallthru
      _
    %p144 = scmp.lt.s32.totalorder %s9, 4
    // Predicated region
    $region13: #{combined_bce_dice_loss.1} parent=5 // pred_check
      %p145 = pneg %p144
    $region14: #{combined_bce_dice_loss.1} parent=5 // pred_check_branch
      %147 = sbr.rel (%p145) target = $region16
    $region15: #{combined_bce_dice_loss.1} parent=5 // pred_region
      // Predicated region
      $region17: #{combined_bce_dice_loss.1} parent=15 // pred_check
        %p148 = pneg %p43
      $region18: #{combined_bce_dice_loss.1} parent=15 // pred_check_branch
        %150 = sbr.rel (%p148) target = $region20
      $region19: #{combined_bce_dice_loss.1} parent=15 // pred_region
        %s151 = smul.u32 2, %s16
        %s152 = smul.u32 2, %s17
        %p153 = scmp.lt.s32.totalorder %s151, 7
        %s154 = scalar_select %p153, %s151, 7
        %p155 = scmp.lt.s32.totalorder %s152, 1
        %s156 = scalar_select %p155, %s152, 1
        %s157 = smul.addr %s154, 2
        %s158 = sadd.s32 %s156, %s157
        %s159 = smul.addr %s158, 8
        %s160 = scalar_lea.vmem %s0, %s159
        %s161 = smul.u32 2, %s16
        %s162 = smul.u32 2, %s17
      $region20: #{combined_bce_dice_loss.1} parent=15 // pred_fallthru
        _
      // Predicated region
      $region21: #{combined_bce_dice_loss.1} parent=15 // pred_check
        %p163 = pneg %p71
      $region22: #{combined_bce_dice_loss.1} parent=15 // pred_check_branch
        %165 = sbr.rel (%p163) target = $region24
      $region23: #{combined_bce_dice_loss.1} parent=15 // pred_region
        %s166 = smul.u32 2, %s16
        %s167 = smul.u32 2, %s17
        %p168 = scmp.lt.s32.totalorder %s166, 7
        %s169 = scalar_select %p168, %s166, 7
        %p170 = scmp.lt.s32.totalorder %s167, 1
        %s171 = scalar_select %p170, %s167, 1
        %s172 = smul.addr %s169, 2
        %s173 = sadd.s32 %s171, %s172
        %s174 = smul.addr %s173, 4
        %s175 = scalar_lea.vmem %s1, %s174
        %s176 = smul.u32 2, %s16
        %s177 = smul.u32 2, %s17
      $region24: #{combined_bce_dice_loss.1} parent=15 // pred_fallthru
        _
      // Predicated region
      $region25: #{combined_bce_dice_loss.1} parent=15 // pred_check
        %p178 = pneg %p97
      $region26: #{combined_bce_dice_loss.1} parent=15 // pred_check_branch
        %180 = sbr.rel (%p178) target = $region28
      $region27: #{combined_bce_dice_loss.1} parent=15 // pred_region
        %s181 = smul.u32 2, %s16
        %p182 = scmp.lt.s32.totalorder %s181, 7
        %s183 = scalar_select %p182, %s181, 7
        %s184 = smul.addr %s183, 8
        %s185 = scalar_lea.vmem %s2, %s184
        %s186 = smul.u32 2, %s16
      $region28: #{combined_bce_dice_loss.1} parent=15 // pred_fallthru
        _
    $region16: #{combined_bce_dice_loss.1} parent=5 // pred_fallthru
      _
    %p187 = scmp.le.s32.totalorder 1, %s9
    %p188 = scmp.lt.s32.totalorder %s9, 5
    %p189 = pnand %p187, %p188
    %p190 = pneg %p189
    // Predicated region
    $region29: #{combined_bce_dice_loss.1} parent=5 // pred_check
      _
    $region30: #{combined_bce_dice_loss.1} parent=5 // pred_check_branch
      %192 = sbr.rel (%p189) target = $region32
    $region31: #{combined_bce_dice_loss.1} parent=5 // pred_region
      %s193 = ssub.s32 %s9, 1
      %s194 = smul.u32 2, %s18
      %s195 = smul.u32 2, %s19
      %p196 = scmp.lt.s32.totalorder %s194, 7
      %s197 = scalar_select %p196, %s194, 7
      %p198 = scmp.lt.s32.totalorder %s195, 1
      %s199 = scalar_select %p198, %s195, 1
      %s200 = smul.addr %s197, 2
      %s201 = sadd.s32 %s199, %s200
      %s202 = smul.addr %s201, 8
      %s203 = scalar_lea.vmem %s0, %s202
      %p204 = pneg %p49
      %p205 = pneg %p46
      %s206 = smul.u32 2, %s18
      %s207 = smul.u32 2, %s19
      %p208 = scmp.lt.s32.totalorder %s206, 7
      %s209 = scalar_select %p208, %s206, 7
      %p210 = scmp.lt.s32.totalorder %s207, 1
      %s211 = scalar_select %p210, %s207, 1
      %s212 = smul.addr %s209, 2
      %s213 = sadd.s32 %s211, %s212
      %s214 = smul.addr %s213, 4
      %s215 = scalar_lea.vmem %s1, %s214
      %p216 = pneg %p77
      %p217 = pneg %p74
      %s218 = smul.u32 2, %s18
      %p219 = scmp.lt.s32.totalorder %s218, 7
      %s220 = scalar_select %p219, %s218, 7
      %s221 = smul.addr %s220, 8
      %s222 = scalar_lea.vmem %s2, %s221
      %p223 = pneg %p103
      %p224 = pneg %p100
      %p225 = pneg %p129
      %p226 = pneg %p126
      %p227 = scmp.lt.s32.totalorder %s18, 3
      %s228 = scalar_select %p227, %s18, 3
      %s229 = smul.addr %s228, 16
      %s230 = smul.addr %s229, 8
      %s231 = scalar_lea.vmem %s3, %s230
      %s232 = smul.u32 2, %s18
      %s233 = smul.u32 2, %s19
      %p234 = scmp.lt.s32.totalorder %s232, 7
      %s235 = scalar_select %p234, %s232, 7
      %p236 = scmp.lt.s32.totalorder %s233, 1
      %s237 = scalar_select %p236, %s233, 1
      %s238 = smul.addr %s235, 2
      %s239 = sadd.s32 %s237, %s238
      %s240 = smul.addr %s239, 8
      %s241 = scalar_lea.vmem %s0, %s240
      %s242 = smul.u32 2, %s18
      %s243 = smul.u32 2, %s19
      %s244 = smul.u32 2, %s18
      %s245 = smul.u32 2, %s19
      %p246 = scmp.lt.s32.totalorder %s244, 7
      %s247 = scalar_select %p246, %s244, 7
      %p248 = scmp.lt.s32.totalorder %s245, 1
      %s249 = scalar_select %p248, %s245, 1
      %s250 = smul.addr %s247, 2
      %s251 = sadd.s32 %s249, %s250
      %s252 = smul.addr %s251, 4
      %s253 = scalar_lea.vmem %s1, %s252
      %s254 = smul.u32 2, %s18
      %s255 = smul.u32 2, %s19
      %s256 = smul.u32 2, %s18
      %p257 = scmp.lt.s32.totalorder %s256, 7
      %s258 = scalar_select %p257, %s256, 7
      %s259 = smul.addr %s258, 8
      %s260 = scalar_lea.vmem %s2, %s259
      %s261 = smul.u32 2, %s18
      %p262 = scmp.lt.s32.totalorder %s18, 3
      %s263 = scalar_select %p262, %s18, 3
      %s264 = smul.addr %s263, 16
      %s265 = smul.addr %s264, 8
      %s266 = scalar_lea.vmem %s3, %s265
      %p267 = scmp.eq.s32.totalorder %s19, 0
      // Predicated region
      $region33: #{combined_bce_dice_loss.1} parent=31 // pred_check
        %p268 = pneg %p267
      $region34: #{combined_bce_dice_loss.1} parent=31 // pred_check_branch
        %270 = sbr.rel (%p268) target = $region36
      $region35: #{combined_bce_dice_loss.1} parent=31 // pred_region
        %271 = vst [vmem:[%s266] sm:$0xff] 0.0
        %272 = vst [vmem:[%s266 + $0x8] sm:$0xff] 0.0
        %273 = vst [vmem:[%s266 + $0x10] sm:$0xff] 0.0
        %274 = vst [vmem:[%s266 + $0x18] sm:$0xff] 0.0
        %275 = vst [vmem:[%s266 + $0x20] sm:$0xff] 0.0
        %276 = vst [vmem:[%s266 + $0x28] sm:$0xff] 0.0
        %277 = vst [vmem:[%s266 + $0x30] sm:$0xff] 0.0
        %278 = vst [vmem:[%s266 + $0x38] sm:$0xff] 0.0
        %279 = vst [vmem:[%s266 + $0x40] sm:$0xff] 0.0
        %280 = vst [vmem:[%s266 + $0x48] sm:$0xff] 0.0
        %281 = vst [vmem:[%s266 + $0x50] sm:$0xff] 0.0
        %282 = vst [vmem:[%s266 + $0x58] sm:$0xff] 0.0
        %283 = vst [vmem:[%s266 + $0x60] sm:$0xff] 0.0
        %284 = vst [vmem:[%s266 + $0x68] sm:$0xff] 0.0
        %285 = vst [vmem:[%s266 + $0x70] sm:$0xff] 0.0
        %286 = vst [vmem:[%s266 + $0x78] sm:$0xff] 0.0
      $region36: #{combined_bce_dice_loss.1} parent=31 // pred_fallthru
        _
      %v287 = vld [vmem:[%s260] sm:$0xff]
      %v288 = vld [vmem:[%s260 + $0x8] sm:$0xff]
      %290 = vset.pattern.permute.xlu0 0
      %291 = vperm.xlu0 %290, %v287
      %v292 = vpop.permute.xlu0 %291
      %295 = vset.pattern.permute.xlu0 0
      %296 = vperm.xlu0 %295, %v288
      %v297 = vpop.permute.xlu0 %296
      %p299 = scmp.eq.s32.totalorder %s18, 3
      // Predicated region
      $region37: #{combined_bce_dice_loss.1} parent=31 // pred_check
        %p300 = pneg %p299
      $region38: #{combined_bce_dice_loss.1} parent=31 // pred_check_branch
        %302 = sbr.rel (%p300) target = $region40
      $region39: #{combined_bce_dice_loss.1} parent=31 // pred_region
        %s303 = smul.u32 %s18, 16
        %v304 = vlaneseq
        %v305 = vshrl.u32 %v304, 7
        %v306 = vadd.s32 %v305, 8
        %v307 = vstv %s303
        %v308 = vadd.s32 %v307, %v305
        %v309 = vadd.s32 %v307, %v306
        %vm310 = vcmp.lt.s32.totalorder %v308, 58
        %vm311 = vcmp.lt.s32.totalorder %v309, 58
        %v312 = vld [vmem:[%s241] sm:$0xff]
        %v313 = vld [vmem:[%s241 + $0x8] sm:$0xff]
        %v314 = vld [vmem:[%s241 + $0x10] sm:$0xff]
        %v315 = vld [vmem:[%s241 + $0x18] sm:$0xff]
        %v316 = vld [vmem:[%s253] sm:$0xff]
        %v317 = vld [vmem:[%s253 + $0x8] sm:$0xff]
        %v318 = vunpack.c.l.bf16 %v316
        %v319 = vunpack.c.h.bf16 %v316
        %v320 = vunpack.c.l.bf16 %v317
        %v321 = vunpack.c.h.bf16 %v317
        %v322 = vand.u32 2147483647, %v312
        %v323 = vand.u32 2147483647, %v313
        %v324 = vand.u32 2147483647, %v314
        %v325 = vand.u32 2147483647, %v315
        %v326 = vsub.f32 0.0, %v322
        %v327 = vsub.f32 0.0, %v323
        %v328 = vsub.f32 0.0, %v324
        %v329 = vsub.f32 0.0, %v325
        %v330 = vmul.f32 %v326, 1.442695
        %v331 = vpow.pop %v330
        %v332 = vmul.f32 %v327, 1.442695
        %v333 = vpow.pop %v332
        %v334 = vmul.f32 %v328, 1.442695
        %v335 = vpow.pop %v334
        %v336 = vmul.f32 %v329, 1.442695
        %v337 = vpow.pop %v336
        %v338 = vsub.f32 0.0, %v312
        %v339 = vsub.f32 0.0, %v313
        %v340 = vsub.f32 0.0, %v314
        %v341 = vsub.f32 0.0, %v315
        %v342 = vmax.f32 %v338, 0.0
        %v343 = vmax.f32 %v339, 0.0
        %v344 = vmax.f32 %v340, 0.0
        %v345 = vmax.f32 %v341, 0.0
        %v346 = vadd.f32 %v331, 1.0
        %v347 = vlog2.pop %v346
        %v348 = vmul.f32 %v347, 0.6931472
        %v349 = vmul.f32 -0.5, %v331
        %v350 = vadd.f32 %v349, 1.0
        %v351 = vmul.f32 %v350, %v331
        %v352 = vand.u32 2147483647, %v331
        %vm353 = vcmp.lt.f32.partialorder %v352, 0.0004427343
        %v354 = vsel %vm353, %v351, %v348
        %v355 = vadd.f32 %v333, 1.0
        %v356 = vlog2.pop %v355
        %v357 = vmul.f32 %v356, 0.6931472
        %v358 = vmul.f32 -0.5, %v333
        %v359 = vadd.f32 %v358, 1.0
        %v360 = vmul.f32 %v359, %v333
        %v361 = vand.u32 2147483647, %v333
        %vm362 = vcmp.lt.f32.partialorder %v361, 0.0004427343
        %v363 = vsel %vm362, %v360, %v357
        %v364 = vadd.f32 %v335, 1.0
        %v365 = vlog2.pop %v364
        %v366 = vmul.f32 %v365, 0.6931472
        %v367 = vmul.f32 -0.5, %v335
        %v368 = vadd.f32 %v367, 1.0
        %v369 = vmul.f32 %v368, %v335
        %v370 = vand.u32 2147483647, %v335
        %vm371 = vcmp.lt.f32.partialorder %v370, 0.0004427343
        %v372 = vsel %vm371, %v369, %v366
        %v373 = vadd.f32 %v337, 1.0
        %v374 = vlog2.pop %v373
        %v375 = vmul.f32 %v374, 0.6931472
        %v376 = vmul.f32 -0.5, %v337
        %v377 = vadd.f32 %v376, 1.0
        %v378 = vmul.f32 %v377, %v337
        %v379 = vand.u32 2147483647, %v337
        %vm380 = vcmp.lt.f32.partialorder %v379, 0.0004427343
        %v381 = vsel %vm380, %v378, %v375
        %v382 = vadd.f32 %v342, %v354
        %v383 = vadd.f32 %v343, %v363
        %v384 = vadd.f32 %v344, %v372
        %v385 = vadd.f32 %v345, %v381
        %v386 = vsub.f32 1.0, %v318
        %v387 = vsub.f32 1.0, %v319
        %v388 = vsub.f32 1.0, %v320
        %v389 = vsub.f32 1.0, %v321
        %v390 = vmul.f32 %v386, %v312
        %v391 = vmul.f32 %v387, %v313
        %v392 = vmul.f32 %v388, %v314
        %v393 = vmul.f32 %v389, %v315
        %v394 = vmul.f32 %v292, %v318
        %v395 = vmul.f32 %v292, %v319
        %v396 = vmul.f32 %v297, %v320
        %v397 = vmul.f32 %v297, %v321
        %v398 = vadd.f32 %v394, 1.0
        %v399 = vadd.f32 %v395, 1.0
        %v400 = vadd.f32 %v396, 1.0
        %v401 = vadd.f32 %v397, 1.0
        %v402 = vmul.f32 %v398, %v382
        %v403 = vmul.f32 %v399, %v383
        %v404 = vmul.f32 %v400, %v384
        %v405 = vmul.f32 %v401, %v385
        %v406 = vadd.f32 %v390, %v402
        %v407 = vadd.f32 %v391, %v403
        %v408 = vadd.f32 %v392, %v404
        %v409 = vadd.f32 %v393, %v405
        %v410 = vadd.f32 %v331, 1.0
        %v411 = vadd.f32 %v333, 1.0
        %v412 = vadd.f32 %v335, 1.0
        %v413 = vadd.f32 %v337, 1.0
        %v414 = vrcp.pop %v410
        %v415 = vrcp.pop %v411
        %v416 = vrcp.pop %v412
        %v417 = vrcp.pop %v413
        %v418 = vmul.f32 %v410, %v414
        %v419 = vmul.f32 %v411, %v415
        %v420 = vmul.f32 %v412, %v416
        %v421 = vmul.f32 %v413, %v417
        %v422 = vsub.f32 2.0, %v418
        %v423 = vsub.f32 2.0, %v419
        %v424 = vsub.f32 2.0, %v420
        %v425 = vsub.f32 2.0, %v421
        %v426 = vmul.f32 %v414, %v422
        %v427 = vmul.f32 %v415, %v423
        %v428 = vmul.f32 %v416, %v424
        %v429 = vmul.f32 %v417, %v425
        %vm430 = vcmp.ge.f32.partialorder %v312, 0.0
        %vm431 = vcmp.ge.f32.partialorder %v313, 0.0
        %vm432 = vcmp.ge.f32.partialorder %v314, 0.0
        %vm433 = vcmp.ge.f32.partialorder %v315, 0.0
        %v434 = vsub.f32 1.0, %v426
        %v435 = vsub.f32 1.0, %v427
        %v436 = vsub.f32 1.0, %v428
        %v437 = vsub.f32 1.0, %v429
        %v438 = vsel %vm430, %v426, %v434
        %v439 = vsel %vm431, %v427, %v435
        %v440 = vsel %vm432, %v428, %v436
        %v441 = vsel %vm433, %v429, %v437
        %v442 = vsel %vm310, %v406, 0.0
        %v443 = vsel %vm310, %v407, 0.0
        %v444 = vsel %vm311, %v408, 0.0
        %v445 = vsel %vm311, %v409, 0.0
        %v446 = vsel %vm310, %v438, 0.0
        %v447 = vsel %vm310, %v439, 0.0
        %v448 = vsel %vm311, %v440, 0.0
        %v449 = vsel %vm311, %v441, 0.0
        %v450 = vsel %vm310, %v318, 0.0
        %v451 = vsel %vm310, %v319, 0.0
        %v452 = vsel %vm311, %v320, 0.0
        %v453 = vsel %vm311, %v321, 0.0
        %v454 = vadd.f32 %v442, 0.0
        %v455 = vadd.f32 %v443, 0.0
        %v456 = vadd.f32 %v444, 0.0
        %v457 = vadd.f32 %v445, 0.0
        %v458 = vmul.f32 %v446, %v450
        %v459 = vmul.f32 %v447, %v451
        %v460 = vmul.f32 %v448, %v452
        %v461 = vmul.f32 %v449, %v453
        %v462 = vadd.f32 %v458, 0.0
        %v463 = vadd.f32 %v459, 0.0
        %v464 = vadd.f32 %v460, 0.0
        %v465 = vadd.f32 %v461, 0.0
        %v466 = vadd.f32 %v446, 0.0
        %v467 = vadd.f32 %v447, 0.0
        %v468 = vadd.f32 %v448, 0.0
        %v469 = vadd.f32 %v449, 0.0
        %v470 = vadd.f32 %v450, 0.0
        %v471 = vadd.f32 %v451, 0.0
        %v472 = vadd.f32 %v452, 0.0
        %v473 = vadd.f32 %v453, 0.0
        %v474 = vld [vmem:[%s266] sm:$0xff]
        %v475 = vld [vmem:[%s266 + $0x8] sm:$0xff]
        %v476 = vld [vmem:[%s266 + $0x10] sm:$0xff]
        %v477 = vld [vmem:[%s266 + $0x18] sm:$0xff]
        %v478 = vadd.f32 %v474, %v454
        %v479 = vadd.f32 %v475, %v455
        %v480 = vadd.f32 %v476, %v456
        %v481 = vadd.f32 %v477, %v457
        %482 = vst [vmem:[%s266] sm:$0xff] %v478
        %483 = vst [vmem:[%s266 + $0x8] sm:$0xff] %v479
        %484 = vst [vmem:[%s266 + $0x10] sm:$0xff] %v480
        %485 = vst [vmem:[%s266 + $0x18] sm:$0xff] %v481
        %s486 = scalar_lea.vmem %s266, 32
        %v487 = vld [vmem:[%s486] sm:$0xff]
        %v488 = vld [vmem:[%s486 + $0x8] sm:$0xff]
        %v489 = vld [vmem:[%s486 + $0x10] sm:$0xff]
        %v490 = vld [vmem:[%s486 + $0x18] sm:$0xff]
        %v491 = vadd.f32 %v487, %v462
        %v492 = vadd.f32 %v488, %v463
        %v493 = vadd.f32 %v489, %v464
        %v494 = vadd.f32 %v490, %v465
        %495 = vst [vmem:[%s486] sm:$0xff] %v491
        %496 = vst [vmem:[%s486 + $0x8] sm:$0xff] %v492
        %497 = vst [vmem:[%s486 + $0x10] sm:$0xff] %v493
        %498 = vst [vmem:[%s486 + $0x18] sm:$0xff] %v494
        %s499 = scalar_lea.vmem %s266, 64
        %v500 = vld [vmem:[%s499] sm:$0xff]
        %v501 = vld [vmem:[%s499 + $0x8] sm:$0xff]
        %v502 = vld [vmem:[%s499 + $0x10] sm:$0xff]
        %v503 = vld [vmem:[%s499 + $0x18] sm:$0xff]
        %v504 = vadd.f32 %v500, %v466
        %v505 = vadd.f32 %v501, %v467
        %v506 = vadd.f32 %v502, %v468
        %v507 = vadd.f32 %v503, %v469
        %508 = vst [vmem:[%s499] sm:$0xff] %v504
        %509 = vst [vmem:[%s499 + $0x8] sm:$0xff] %v505
        %510 = vst [vmem:[%s499 + $0x10] sm:$0xff] %v506
        %511 = vst [vmem:[%s499 + $0x18] sm:$0xff] %v507
        %s512 = scalar_lea.vmem %s266, 96
        %v513 = vld [vmem:[%s512] sm:$0xff]
        %v514 = vld [vmem:[%s512 + $0x8] sm:$0xff]
        %v515 = vld [vmem:[%s512 + $0x10] sm:$0xff]
        %v516 = vld [vmem:[%s512 + $0x18] sm:$0xff]
        %v517 = vadd.f32 %v513, %v470
        %v518 = vadd.f32 %v514, %v471
        %v519 = vadd.f32 %v515, %v472
        %v520 = vadd.f32 %v516, %v473
        %521 = vst [vmem:[%s512] sm:$0xff] %v517
        %522 = vst [vmem:[%s512 + $0x8] sm:$0xff] %v518
        %523 = vst [vmem:[%s512 + $0x10] sm:$0xff] %v519
        %524 = vst [vmem:[%s512 + $0x18] sm:$0xff] %v520
      $region40: #{combined_bce_dice_loss.1} parent=31 // pred_fallthru
        _
      %p525 = scmp.ne.s32.totalorder %s18, 3
      // Predicated region
      $region41: #{combined_bce_dice_loss.1} parent=31 // pred_check
        %p526 = pneg %p525
      $region42: #{combined_bce_dice_loss.1} parent=31 // pred_check_branch
        %528 = sbr.rel (%p526) target = $region44
      $region43: #{combined_bce_dice_loss.1} parent=31 // pred_region
        %v529 = vld [vmem:[%s241] sm:$0xff]
        %v530 = vld [vmem:[%s241 + $0x8] sm:$0xff]
        %v531 = vld [vmem:[%s241 + $0x10] sm:$0xff]
        %v532 = vld [vmem:[%s241 + $0x18] sm:$0xff]
        %v533 = vld [vmem:[%s253] sm:$0xff]
        %v534 = vld [vmem:[%s253 + $0x8] sm:$0xff]
        %v535 = vunpack.c.l.bf16 %v533
        %v536 = vunpack.c.h.bf16 %v533
        %v537 = vunpack.c.l.bf16 %v534
        %v538 = vunpack.c.h.bf16 %v534
        %v539 = vand.u32 2147483647, %v529
        %v540 = vand.u32 2147483647, %v530
        %v541 = vand.u32 2147483647, %v531
        %v542 = vand.u32 2147483647, %v532
        %v543 = vsub.f32 0.0, %v539
        %v544 = vsub.f32 0.0, %v540
        %v545 = vsub.f32 0.0, %v541
        %v546 = vsub.f32 0.0, %v542
        %v547 = vmul.f32 %v543, 1.442695
        %v548 = vpow.pop %v547
        %v549 = vmul.f32 %v544, 1.442695
        %v550 = vpow.pop %v549
        %v551 = vmul.f32 %v545, 1.442695
        %v552 = vpow.pop %v551
        %v553 = vmul.f32 %v546, 1.442695
        %v554 = vpow.pop %v553
        %v555 = vsub.f32 0.0, %v529
        %v556 = vsub.f32 0.0, %v530
        %v557 = vsub.f32 0.0, %v531
        %v558 = vsub.f32 0.0, %v532
        %v559 = vmax.f32 %v555, 0.0
        %v560 = vmax.f32 %v556, 0.0
        %v561 = vmax.f32 %v557, 0.0
        %v562 = vmax.f32 %v558, 0.0
        %v563 = vadd.f32 %v548, 1.0
        %v564 = vlog2.pop %v563
        %v565 = vmul.f32 %v564, 0.6931472
        %v566 = vmul.f32 -0.5, %v548
        %v567 = vadd.f32 %v566, 1.0
        %v568 = vmul.f32 %v567, %v548
        %v569 = vand.u32 2147483647, %v548
        %vm570 = vcmp.lt.f32.partialorder %v569, 0.0004427343
        %v571 = vsel %vm570, %v568, %v565
        %v572 = vadd.f32 %v550, 1.0
        %v573 = vlog2.pop %v572
        %v574 = vmul.f32 %v573, 0.6931472
        %v575 = vmul.f32 -0.5, %v550
        %v576 = vadd.f32 %v575, 1.0
        %v577 = vmul.f32 %v576, %v550
        %v578 = vand.u32 2147483647, %v550
        %vm579 = vcmp.lt.f32.partialorder %v578, 0.0004427343
        %v580 = vsel %vm579, %v577, %v574
        %v581 = vadd.f32 %v552, 1.0
        %v582 = vlog2.pop %v581
        %v583 = vmul.f32 %v582, 0.6931472
        %v584 = vmul.f32 -0.5, %v552
        %v585 = vadd.f32 %v584, 1.0
        %v586 = vmul.f32 %v585, %v552
        %v587 = vand.u32 2147483647, %v552
        %vm588 = vcmp.lt.f32.partialorder %v587, 0.0004427343
        %v589 = vsel %vm588, %v586, %v583
        %v590 = vadd.f32 %v554, 1.0
        %v591 = vlog2.pop %v590
        %v592 = vmul.f32 %v591, 0.6931472
        %v593 = vmul.f32 -0.5, %v554
        %v594 = vadd.f32 %v593, 1.0
        %v595 = vmul.f32 %v594, %v554
        %v596 = vand.u32 2147483647, %v554
        %vm597 = vcmp.lt.f32.partialorder %v596, 0.0004427343
        %v598 = vsel %vm597, %v595, %v592
        %v599 = vadd.f32 %v559, %v571
        %v600 = vadd.f32 %v560, %v580
        %v601 = vadd.f32 %v561, %v589
        %v602 = vadd.f32 %v562, %v598
        %v603 = vsub.f32 1.0, %v535
        %v604 = vsub.f32 1.0, %v536
        %v605 = vsub.f32 1.0, %v537
        %v606 = vsub.f32 1.0, %v538
        %v607 = vmul.f32 %v603, %v529
        %v608 = vmul.f32 %v604, %v530
        %v609 = vmul.f32 %v605, %v531
        %v610 = vmul.f32 %v606, %v532
        %v611 = vmul.f32 %v292, %v535
        %v612 = vmul.f32 %v292, %v536
        %v613 = vmul.f32 %v297, %v537
        %v614 = vmul.f32 %v297, %v538
        %v615 = vadd.f32 %v611, 1.0
        %v616 = vadd.f32 %v612, 1.0
        %v617 = vadd.f32 %v613, 1.0
        %v618 = vadd.f32 %v614, 1.0
        %v619 = vmul.f32 %v615, %v599
        %v620 = vmul.f32 %v616, %v600
        %v621 = vmul.f32 %v617, %v601
        %v622 = vmul.f32 %v618, %v602
        %v623 = vadd.f32 %v607, %v619
        %v624 = vadd.f32 %v608, %v620
        %v625 = vadd.f32 %v609, %v621
        %v626 = vadd.f32 %v610, %v622
        %v627 = vadd.f32 %v548, 1.0
        %v628 = vadd.f32 %v550, 1.0
        %v629 = vadd.f32 %v552, 1.0
        %v630 = vadd.f32 %v554, 1.0
        %v631 = vrcp.pop %v627
        %v632 = vrcp.pop %v628
        %v633 = vrcp.pop %v629
        %v634 = vrcp.pop %v630
        %v635 = vmul.f32 %v627, %v631
        %v636 = vmul.f32 %v628, %v632
        %v637 = vmul.f32 %v629, %v633
        %v638 = vmul.f32 %v630, %v634
        %v639 = vsub.f32 2.0, %v635
        %v640 = vsub.f32 2.0, %v636
        %v641 = vsub.f32 2.0, %v637
        %v642 = vsub.f32 2.0, %v638
        %v643 = vmul.f32 %v631, %v639
        %v644 = vmul.f32 %v632, %v640
        %v645 = vmul.f32 %v633, %v641
        %v646 = vmul.f32 %v634, %v642
        %vm647 = vcmp.ge.f32.partialorder %v529, 0.0
        %vm648 = vcmp.ge.f32.partialorder %v530, 0.0
        %vm649 = vcmp.ge.f32.partialorder %v531, 0.0
        %vm650 = vcmp.ge.f32.partialorder %v532, 0.0
        %v651 = vsub.f32 1.0, %v643
        %v652 = vsub.f32 1.0, %v644
        %v653 = vsub.f32 1.0, %v645
        %v654 = vsub.f32 1.0, %v646
        %v655 = vsel %vm647, %v643, %v651
        %v656 = vsel %vm648, %v644, %v652
        %v657 = vsel %vm649, %v645, %v653
        %v658 = vsel %vm650, %v646, %v654
        %v659 = vadd.f32 %v623, 0.0
        %v660 = vadd.f32 %v624, 0.0
        %v661 = vadd.f32 %v625, 0.0
        %v662 = vadd.f32 %v626, 0.0
        %v663 = vmul.f32 %v655, %v535
        %v664 = vmul.f32 %v656, %v536
        %v665 = vmul.f32 %v657, %v537
        %v666 = vmul.f32 %v658, %v538
        %v667 = vadd.f32 %v663, 0.0
        %v668 = vadd.f32 %v664, 0.0
        %v669 = vadd.f32 %v665, 0.0
        %v670 = vadd.f32 %v666, 0.0
        %v671 = vadd.f32 %v655, 0.0
        %v672 = vadd.f32 %v656, 0.0
        %v673 = vadd.f32 %v657, 0.0
        %v674 = vadd.f32 %v658, 0.0
        %v675 = vadd.f32 %v535, 0.0
        %v676 = vadd.f32 %v536, 0.0
        %v677 = vadd.f32 %v537, 0.0
        %v678 = vadd.f32 %v538, 0.0
        %v679 = vld [vmem:[%s266] sm:$0xff]
        %v680 = vld [vmem:[%s266 + $0x8] sm:$0xff]
        %v681 = vld [vmem:[%s266 + $0x10] sm:$0xff]
        %v682 = vld [vmem:[%s266 + $0x18] sm:$0xff]
        %v683 = vadd.f32 %v679, %v659
        %v684 = vadd.f32 %v680, %v660
        %v685 = vadd.f32 %v681, %v661
        %v686 = vadd.f32 %v682, %v662
        %687 = vst [vmem:[%s266] sm:$0xff] %v683
        %688 = vst [vmem:[%s266 + $0x8] sm:$0xff] %v684
        %689 = vst [vmem:[%s266 + $0x10] sm:$0xff] %v685
        %690 = vst [vmem:[%s266 + $0x18] sm:$0xff] %v686
        %s691 = scalar_lea.vmem %s266, 32
        %v692 = vld [vmem:[%s691] sm:$0xff]
        %v693 = vld [vmem:[%s691 + $0x8] sm:$0xff]
        %v694 = vld [vmem:[%s691 + $0x10] sm:$0xff]
        %v695 = vld [vmem:[%s691 + $0x18] sm:$0xff]
        %v696 = vadd.f32 %v692, %v667
        %v697 = vadd.f32 %v693, %v668
        %v698 = vadd.f32 %v694, %v669
        %v699 = vadd.f32 %v695, %v670
        %700 = vst [vmem:[%s691] sm:$0xff] %v696
        %701 = vst [vmem:[%s691 + $0x8] sm:$0xff] %v697
        %702 = vst [vmem:[%s691 + $0x10] sm:$0xff] %v698
        %703 = vst [vmem:[%s691 + $0x18] sm:$0xff] %v699
        %s704 = scalar_lea.vmem %s266, 64
        %v705 = vld [vmem:[%s704] sm:$0xff]
        %v706 = vld [vmem:[%s704 + $0x8] sm:$0xff]
        %v707 = vld [vmem:[%s704 + $0x10] sm:$0xff]
        %v708 = vld [vmem:[%s704 + $0x18] sm:$0xff]
        %v709 = vadd.f32 %v705, %v671
        %v710 = vadd.f32 %v706, %v672
        %v711 = vadd.f32 %v707, %v673
        %v712 = vadd.f32 %v708, %v674
        %713 = vst [vmem:[%s704] sm:$0xff] %v709
        %714 = vst [vmem:[%s704 + $0x8] sm:$0xff] %v710
        %715 = vst [vmem:[%s704 + $0x10] sm:$0xff] %v711
        %716 = vst [vmem:[%s704 + $0x18] sm:$0xff] %v712
        %s717 = scalar_lea.vmem %s266, 96
        %v718 = vld [vmem:[%s717] sm:$0xff]
        %v719 = vld [vmem:[%s717 + $0x8] sm:$0xff]
        %v720 = vld [vmem:[%s717 + $0x10] sm:$0xff]
        %v721 = vld [vmem:[%s717 + $0x18] sm:$0xff]
        %v722 = vadd.f32 %v718, %v675
        %v723 = vadd.f32 %v719, %v676
        %v724 = vadd.f32 %v720, %v677
        %v725 = vadd.f32 %v721, %v678
        %726 = vst [vmem:[%s717] sm:$0xff] %v722
        %727 = vst [vmem:[%s717 + $0x8] sm:$0xff] %v723
        %728 = vst [vmem:[%s717 + $0x10] sm:$0xff] %v724
        %729 = vst [vmem:[%s717 + $0x18] sm:$0xff] %v725
      $region44: #{combined_bce_dice_loss.1} parent=31 // pred_fallthru
        _
      %p730 = scmp.lt.s32.totalorder %s18, 3
      %s731 = scalar_select %p730, %s18, 3
      %s732 = smul.addr %s731, 16
      %s733 = smul.addr %s732, 8
      %s734 = scalar_lea.vmem %s3, %s733
      // Predicated region
      $region45: #{combined_bce_dice_loss.1} parent=31 // pred_check
        %p735 = pneg %p126
      $region46: #{combined_bce_dice_loss.1} parent=31 // pred_check_branch
        %737 = sbr.rel (%p735) target = $region48
      $region47: #{combined_bce_dice_loss.1} parent=31 // pred_region
        _
      $region48: #{combined_bce_dice_loss.1} parent=31 // pred_fallthru
        _
    $region32: #{combined_bce_dice_loss.1} parent=5 // pred_fallthru
      _
    %p738 = scmp.le.s32.totalorder 2, %s9
    // Predicated region
    $region49: #{combined_bce_dice_loss.1} parent=5 // pred_check
      %p739 = pneg %p738
    $region50: #{combined_bce_dice_loss.1} parent=5 // pred_check_branch
      %741 = sbr.rel (%p739) target = $region52
    $region51: #{combined_bce_dice_loss.1} parent=5 // pred_region
      %s742 = ssub.s32 %s9, 2
      // Predicated region
      $region53: #{combined_bce_dice_loss.1} parent=51 // pred_check
        %p743 = pneg %p132
      $region54: #{combined_bce_dice_loss.1} parent=51 // pred_check_branch
        %745 = sbr.rel (%p743) target = $region56
      $region55: #{combined_bce_dice_loss.1} parent=51 // pred_region
        %p746 = scmp.lt.s32.totalorder %s20, 3
        %s747 = scalar_select %p746, %s20, 3
        %s748 = smul.addr %s747, 16
        %s749 = smul.addr %s748, 8
        %s750 = scalar_lea.vmem %s3, %s749
      $region56: #{combined_bce_dice_loss.1} parent=51 // pred_fallthru
        _
    $region52: #{combined_bce_dice_loss.1} parent=5 // pred_fallthru
      _
  $region6: #{combined_bce_dice_loss.1} parent=0 // loop_footer
    %s13 = sadd.s32 1, %s9
  $region7: #{combined_bce_dice_loss.1} parent=0 // loop_footer_branch
    %8 = sbr.rel target = $region3
  $region8: #{combined_bce_dice_loss.1} parent=0 // loop_exit
    _

</llo_original>
